<compile_context>
chip_gen: v7x
topology: tpu7x:2x2x1
jax: 0.10.0
libtpu: 0.0.40
codegen_flags: <defaults>
</compile_context>

<pallas_src>
import functools

import jax
import jax.numpy as jnp
from jax.experimental import pallas as pl
from jax.experimental.pallas import tpu as pltpu

LANE = 128
ROW_TILE_MAX = 2048  # (2048, 128) f32 block = 1 MiB per buffer


def _adaptive_kernel(params_ref, x_ref, o_ref, *, func):
    # params_ref: SMEM f32 [alpha, beta, gamma] (scalar prefetch).
    alpha = params_ref[0]
    beta = params_ref[1]
    gamma = params_ref[2]
    # Compute in f32 (matches the f32 PyTorch reference; VPU/EUP slots have
    # huge slack in this memory-bound kernel), cast only on the store.
    x = x_ref[...].astype(jnp.float32)
    y = alpha * func(beta * x + gamma)
    o_ref[...] = y.astype(o_ref.dtype)


def _choose_row_tile(rows, itemsize):
    """Pick a row-block size: big (~1 MiB), sublane-aligned, >=2 grid steps."""
    # Sublane packing multiple: 8 for 32-bit, 16 for 16-bit, 32 for 8-bit.
    sub = max(8, 32 // max(itemsize, 1))
    if rows <= sub:
        # Tiny input: single block equal to the full array dims (allowed).
        return rows
    # Target ~1 MiB blocks but keep >= 2 grid steps when there is enough work
    # so the "parallel" grid axis can shard across v7x's two TensorCores.
    tile = min(ROW_TILE_MAX, pl.cdiv(rows, 2))
    return pl.cdiv(tile, sub) * sub


def adaptive_activation(x, alpha, beta, gamma, func=jnp.tanh):
    """y = alpha * func(beta * x + gamma), elementwise, via a Pallas TPU kernel."""
    orig_shape = x.shape
    orig_dtype = x.dtype
    n = x.size
    itemsize = jnp.dtype(orig_dtype).itemsize

    # Flatten to a lane-dense 2-D slab (rows, 128). Only pad when n is not a
    # multiple of 128 (padding materializes an extra HBM copy, so skip it in
    # the common aligned case).
    x_flat = jnp.reshape(x, (-1,))
    rem = n % LANE
    if rem != 0:
        # TODO(synk): zero-pad evaluates func at gamma for <=127 padded slots;
        # harmless for standard activations, sliced off below.
        x_flat = jnp.pad(x_flat, (0, LANE - rem))
    rows = x_flat.size // LANE
    x2d = jnp.reshape(x_flat, (rows, LANE))

    row_tile = _choose_row_tile(rows, itemsize)
    grid = (pl.cdiv(rows, row_tile),)  # final block may be partial; Pallas clips

    # Trainable scalars go to SMEM (32-bit words); keep them f32 regardless of
    # the activation dtype.
    params = jnp.stack(
        [
            jnp.asarray(alpha, jnp.float32),
            jnp.asarray(beta, jnp.float32),
            jnp.asarray(gamma, jnp.float32),
        ]
    )

    cost = pl.CostEstimate(
        flops=3 * n,                       # mul, add, mul
        transcendentals=n,                 # one func eval per element
        bytes_accessed=2 * n * itemsize,   # read x + write y
    )

    out2d = pl.pallas_call(
        functools.partial(_adaptive_kernel, func=func),
        out_shape=jax.ShapeDtypeStruct((rows, LANE), orig_dtype),
        grid_spec=pltpu.PrefetchScalarGridSpec(
            num_scalar_prefetch=1,  # params -> SMEM, passed first to kernel
            grid=grid,
            in_specs=[
                pl.BlockSpec((row_tile, LANE), lambda i, params: (i, 0)),
            ],
            out_specs=pl.BlockSpec((row_tile, LANE), lambda i, params: (i, 0)),
        ),
        compiler_params=pltpu.CompilerParams(
            dimension_semantics=("parallel",),
        ),
        cost_estimate=cost,
    )(params, x2d)

    out_flat = jnp.reshape(out2d, (-1,))
    if rem != 0:
        out_flat = out_flat[:n]
    return jnp.reshape(out_flat, orig_shape)


class AdaptiveActivation:
    """JAX mirror of pina's AdaptiveActivationFunctionInterface.

    alpha, beta default to 1.0; gamma defaults to 0.0 (matching the module's
    __init__ code). `fixed` only affects trainability in the original, which
    does not change the forward math, so it is ignored here.
    """

    def __init__(self, func=jnp.tanh, alpha=None, beta=None, gamma=None):
        self.alpha = jnp.float32(1.0 if alpha is None else alpha)
        self.beta = jnp.float32(1.0 if beta is None else beta)
        self.gamma = jnp.float32(0.0 if gamma is None else gamma)
        self.func = func

    def __call__(self, x):
        return adaptive_activation(x, self.alpha, self.beta, self.gamma, self.func)


if __name__ == "__main__":
    key = jax.random.PRNGKey(0)
    # Small NCHW-style input, consistent with an activation inside a convnet.
    x = jax.random.normal(key, (2, 4, 16, 16), dtype=jnp.float32)

    # Non-trivial alpha/beta/gamma to exercise the affine wrapping.
    module = AdaptiveActivation(func=jnp.tanh, alpha=1.5, beta=0.75, gamma=0.1)

    out = module(x)
    out = jax.block_until_ready(out)

    # Correctness check against the pure-JAX reference of the forward pass.
    ref = module.alpha * jnp.tanh(module.beta * x + module.gamma)
    assert out.shape == x.shape and out.dtype == x.dtype
    assert jnp.allclose(out, ref, atol=1e-5, rtol=1e-5)

    print("KERNEL_OK")
</pallas_src>

<mosaic_0001>
module attributes {stable_mosaic.version = 11 : i64} {
  func.func @_adaptive_kernel(%arg0: i32, %arg1: memref<3xf32, #tpu.memory_space<smem>>, %arg2: memref<8x128xf32, #tpu.memory_space<vmem>>, %arg3: memref<8x128xf32, #tpu.memory_space<vmem>>) attributes {dimension_semantics = [#tpu.dimension_semantics<parallel>], iteration_bounds = array<i64: 2>, scalar_prefetch = 1 : i64, scratch_operands = 0 : i64, tpu.core_type = #tpu.core_type<tc>, window_params = [{transform_indices = @transform_0, window_bounds = array<i64: 8, 128>}, {transform_indices = @transform_1, window_bounds = array<i64: 8, 128>}]} {
    %c0 = arith.constant 0 : index
    %0 = memref.load %arg1[%c0] : memref<3xf32, #tpu.memory_space<smem>>
    %c1 = arith.constant 1 : index
    %1 = memref.load %arg1[%c1] : memref<3xf32, #tpu.memory_space<smem>>
    %c2 = arith.constant 2 : index
    %2 = memref.load %arg1[%c2] : memref<3xf32, #tpu.memory_space<smem>>
    %c0_0 = arith.constant 0 : index
    %c0_1 = arith.constant 0 : index
    %3 = vector.load %arg2[%c0_0, %c0_1] : memref<8x128xf32, #tpu.memory_space<vmem>>, vector<8x128xf32>
    %4 = vector.broadcast %1 : f32 to vector<8x128xf32>
    %5 = arith.mulf %4, %3 : vector<8x128xf32>
    %6 = vector.broadcast %2 : f32 to vector<8x128xf32>
    %7 = arith.addf %5, %6 : vector<8x128xf32>
    %8 = math.tanh %7 : vector<8x128xf32>
    %9 = vector.broadcast %0 : f32 to vector<8x128xf32>
    %10 = arith.mulf %9, %8 : vector<8x128xf32>
    %c0_2 = arith.constant 0 : index
    %c0_3 = arith.constant 0 : index
    %11 = vector.load %arg3[%c0_2, %c0_3] : memref<8x128xf32, #tpu.memory_space<vmem>>, vector<8x128xf32>
    tpu.vector_store %arg3[%c0_2, %c0_3], %10 {strides = array<i32>} : memref<8x128xf32, #tpu.memory_space<vmem>>, vector<8x128xf32>,
    return
  }
  func.func @transform_0(%arg0: i32, %arg1: memref<3xf32, #tpu.memory_space<smem>>) -> (i32, i32) {
    %c0_i32 = arith.constant 0 : i32
    %c0_i32_0 = arith.constant 0 : i32
    return %arg0, %c0_i32 : i32, i32
  }
  func.func @transform_1(%arg0: i32, %arg1: memref<3xf32, #tpu.memory_space<smem>>) -> (i32, i32) {
    %c0_i32 = arith.constant 0 : i32
    %c0_i32_0 = arith.constant 0 : i32
    return %arg0, %c0_i32 : i32, i32
  }
}

</mosaic_0001>

<llo_original>
// kernel: tpu_custom_call.1
$region0: #{tpu_custom_call.1}
  #allocation0 [shape = 'u32[]', space=smem, size = 0x4, offset = 0x4, fixed_abs, tag = 'smem constant byte address 0x4 - core index']
  #allocation1 [shape = 'u32[144,128]{1,0:T(1,128)}', space=vmem, size = 0x12000, scoped, tag = 'internal scratch']
  #allocation2 [shape = 's32[1]{0}', space=sflag, size = 0x4, scoped, tag = 'scoped memory for tpu_custom_call.1']
  #allocation3 [shape = 'u8[512]{0}', space=smem, size = 0x200, scoped, tag = 'prefetched SMEM operand 0']
  %s0 = inlined_call_operand.hbm [shape: f32[3], index: 0, kind: input, shape index: {}]
  %s1 = inlined_call_operand.hbm [shape: f32[16,128], index: 1, kind: input, shape index: {}]
  %s2 = inlined_call_operand.hbm [shape: f32[16,128], index: 2, kind: output, shape index: {}]
  %s3 = sld [smem:[#allocation0]]
  $region41: #{tpu_custom_call.1} parent=0
    _
  %s5 = ssub.s32 1, %s3
  %s6 = scalar_select 0, %s5, %s3
  %8 = dma.hbm_to_smem %s0, 16, [#allocation3], [#allocation2]
  %9 = dma.done [#allocation2], 16
  %10 = sfence
  $region1: #{tpu_custom_call.1} parent=0
    #allocation4 [shape = 'u8[8192]{0}', space=vmem, size = 0x2000, scoped, tag = 'input window, operand 1']
    #allocation5 [shape = 's32[2]{0}', space=sflag, size = 0x8, scoped, tag = 'scoped memory for tpu_custom_call.1']
    #allocation6 [shape = 's32[2]{0}', space=sflag, size = 0x8, scoped, tag = 'scoped memory for tpu_custom_call.1']
    #allocation7 [shape = 'u8[8192]{0}', space=vmem, size = 0x2000, scoped, tag = 'output window, operand 0']
    %11 = vsyncpa [#allocation5], 0
    %s12 = scalar_lea.sflag [#allocation5], 1
    %13 = vsyncpa %s12, 0
    %14 = vsyncpa [#allocation6], 0
    %s15 = scalar_lea.sflag [#allocation6], 1
    %16 = vsyncpa %s15, 0
    loop: start=0, step=1, limit=4
    $region2: #{tpu_custom_call.1} parent=1 // loop_pre_header
      _
    $region3: #{tpu_custom_call.1} parent=1 // loop_header
      %s18 = sphi 0, %s22
      %p19 = scmp.ge.s32.totalorder %s18, 4
      %s28 = sphi 0, %s30
      %s31 = sphi 0, %s28
      %s32 = sphi 0, %s31
      %s48 = sphi 0, %s32
      %s54 = sphi 0, %s56
      %s57 = sphi 0, %s54
      %s58 = sphi 0, %s57
      %s74 = sphi 0, %s58
    $region4: #{tpu_custom_call.1} parent=1 // loop_header_branch
      %21 = sbr.rel (%p19) target = $region8
    $region5: #{tpu_custom_call.1} parent=1 // loop_body
      %s23 = ssub.s32 %s18, 1
      %s24 = ssub.s32 %s18, 2
      %s25 = sadd.s32 %s18, 1
      %s26 = ssub.s32 %s18, %s25
      %p27 = scmp.eq.s32.totalorder %s26, 0
      %s29 = sadd.s32 %s28, 1
      %s30 = scalar_select %p27, %s28, %s29
      %p33 = pneg %p27
      %p34 = scmp.eq.s32.totalorder %s18, 1
      %p35 = por %p33, %p34
      %p36 = scmp.ne.s32.totalorder %s28, %s31
      %p37 = scmp.eq.s32.totalorder %s18, 0
      %p38 = por %p36, %p37
      %p39 = scmp.ne.s32.totalorder %s28, %s31
      %p40 = scmp.eq.s32.totalorder %s23, 1
      %p41 = por %p39, %p40
      %p42 = scmp.ne.s32.totalorder %s31, %s32
      %p43 = scmp.eq.s32.totalorder %s23, 0
      %p44 = por %p42, %p43
      %p45 = scmp.ne.s32.totalorder %s31, %s32
      %p46 = scmp.eq.s32.totalorder %s24, 1
      %p47 = por %p45, %p46
      %p49 = scmp.ne.s32.totalorder %s32, %s48
      %p50 = scmp.eq.s32.totalorder %s24, 0
      %p51 = por %p49, %p50
      %s52 = ssub.s32 %s18, %s25
      %p53 = scmp.eq.s32.totalorder %s52, 0
      %s55 = sadd.s32 %s54, 1
      %s56 = scalar_select %p53, %s54, %s55
      %p59 = pneg %p53
      %p60 = scmp.eq.s32.totalorder %s18, 1
      %p61 = por %p59, %p60
      %p62 = scmp.ne.s32.totalorder %s54, %s57
      %p63 = scmp.eq.s32.totalorder %s18, 0
      %p64 = por %p62, %p63
      %p65 = scmp.ne.s32.totalorder %s54, %s57
      %p66 = scmp.eq.s32.totalorder %s23, 1
      %p67 = por %p65, %p66
      %p68 = scmp.ne.s32.totalorder %s57, %s58
      %p69 = scmp.eq.s32.totalorder %s23, 0
      %p70 = por %p68, %p69
      %p71 = scmp.ne.s32.totalorder %s57, %s58
      %p72 = scmp.eq.s32.totalorder %s24, 1
      %p73 = por %p71, %p72
      %p75 = scmp.ne.s32.totalorder %s58, %s74
      %p76 = scmp.eq.s32.totalorder %s24, 0
      %p77 = por %p75, %p76
      %p78 = scmp.le.s32.totalorder 1, %s18
      %p79 = scmp.lt.s32.totalorder %s18, 3
      %p80 = pnand %p78, %p79
      %p81 = pneg %p80
      // Predicated region
      $region9: #{tpu_custom_call.1} parent=5 // pred_check
        _
      $region10: #{tpu_custom_call.1} parent=5 // pred_check_branch
        %83 = sbr.rel (%p80) target = $region12
      $region11: #{tpu_custom_call.1} parent=5 // pred_region
        %s84 = ssub.s32 %s18, 1
      $region12: #{tpu_custom_call.1} parent=5 // pred_fallthru
        _
      %p85 = scmp.lt.s32.totalorder %s18, 2
      // Predicated region
      $region13: #{tpu_custom_call.1} parent=5 // pred_check
        %p86 = pneg %p85
      $region14: #{tpu_custom_call.1} parent=5 // pred_check_branch
        %88 = sbr.rel (%p86) target = $region16
      $region15: #{tpu_custom_call.1} parent=5 // pred_region
        // Predicated region
        $region17: #{tpu_custom_call.1} parent=15 // pred_check
          %p89 = pneg %p38
        $region18: #{tpu_custom_call.1} parent=15 // pred_check_branch
          %91 = sbr.rel (%p89) target = $region20
        $region19: #{tpu_custom_call.1} parent=15 // pred_region
          %s92 = sand.u32 %s28, 1
          %s93 = scalar_lea.sflag [#allocation5], %s92
          %s94 = sand.u32 %s28, 1
          %s95 = smul.addr %s94, 8
          %s96 = scalar_lea.vmem [#allocation4], %s95
          %s98 = ssub.s32 128, 128
          %99 = vsyncadd %s93, %s98
          %s100 = smul.addr %s18, 128
          %s101 = scalar_lea.hbm %s1, %s100
          %s103 = sshll.u32 %s96, 4
          %s104 = int_to_ptr.vmem [resolvable:$true] %s103
          %106 = dma.hbm_to_vmem [thread:$0]  %s101, 128, %s104, %s93
        $region20: #{tpu_custom_call.1} parent=15 // pred_fallthru
          _
      $region16: #{tpu_custom_call.1} parent=5 // pred_fallthru
        _
      %p107 = scmp.le.s32.totalorder 1, %s18
      %p108 = scmp.lt.s32.totalorder %s18, 3
      %p109 = pnand %p107, %p108
      %p110 = pneg %p109
      // Predicated region
      $region21: #{tpu_custom_call.1} parent=5 // pred_check
        _
      $region22: #{tpu_custom_call.1} parent=5 // pred_check_branch
        %112 = sbr.rel (%p109) target = $region24
      $region23: #{tpu_custom_call.1} parent=5 // pred_region
        %s113 = ssub.s32 %s18, 1
        %s114 = sand.u32 %s31, 1
        %s115 = scalar_lea.sflag [#allocation5], %s114
        %s116 = sand.u32 %s31, 1
        %s117 = smul.addr %s116, 8
        %s118 = scalar_lea.vmem [#allocation4], %s117
        // Predicated region
        $region25: #{tpu_custom_call.1} parent=23 // pred_check
          %p119 = pneg %p44
        $region26: #{tpu_custom_call.1} parent=23 // pred_check_branch
          %121 = sbr.rel (%p119) target = $region28
        $region27: #{tpu_custom_call.1} parent=23 // pred_region
          %122 = dma.done %s115, 128
        $region28: #{tpu_custom_call.1} parent=23 // pred_fallthru
          _
        %s123 = sand.u32 %s31, 1
        %s124 = scalar_lea.sflag [#allocation5], %s123
        %s125 = sand.u32 %s31, 1
        %s126 = smul.addr %s125, 8
        %s127 = scalar_lea.vmem [#allocation4], %s126
        %p128 = pneg %p44
        %p129 = pneg %p41
        %p130 = pneg %p70
        %p131 = pneg %p67
        %s132 = sand.u32 %s57, 1
        %s133 = scalar_lea.sflag [#allocation6], %s132
        %s134 = sand.u32 %s57, 1
        %s135 = smul.addr %s134, 8
        %s136 = scalar_lea.vmem [#allocation7], %s135
        %s137 = sld [smem:[#allocation3]]
        %s138 = sld [smem:[#allocation3 + $0x1]]
        %s139 = sld [smem:[#allocation3 + $0x2]]
        %v140 = vld [vmem:[%s118] sm:$0xff]
        %v141 = vstv %s138
        %v142 = vmul.f32 %v141, %v140
        %v143 = vstv %s139
        %v144 = vadd.f32 %v142, %v143
        %v145 = vtanh.pop %v144
        %v146 = vstv %s137
        %v147 = vmul.f32 %v146, %v145
        %148 = vst [vmem:[%s136] sm:$0xff] %v147
        %s149 = sand.u32 %s57, 1
        %s150 = scalar_lea.sflag [#allocation6], %s149
        %s151 = sand.u32 %s57, 1
        %s152 = smul.addr %s151, 8
        %s153 = scalar_lea.vmem [#allocation7], %s152
        // Predicated region
        $region29: #{tpu_custom_call.1} parent=23 // pred_check
          %p154 = pneg %p67
        $region30: #{tpu_custom_call.1} parent=23 // pred_check_branch
          %156 = sbr.rel (%p154) target = $region32
        $region31: #{tpu_custom_call.1} parent=23 // pred_region
          %s158 = ssub.s32 128, 128
          %159 = vsyncadd %s150, %s158
          %s160 = smul.addr %s23, 128
          %s161 = scalar_lea.hbm %s2, %s160
          %s163 = sshll.u32 %s153, 4
          %s164 = int_to_ptr.vmem [resolvable:$true] %s163
          %166 = dma.vmem_to_hbm [thread:$0]  %s164, 128, %s161, %s150
        $region32: #{tpu_custom_call.1} parent=23 // pred_fallthru
          _
      $region24: #{tpu_custom_call.1} parent=5 // pred_fallthru
        _
      %p167 = scmp.le.s32.totalorder 2, %s18
      // Predicated region
      $region33: #{tpu_custom_call.1} parent=5 // pred_check
        %p168 = pneg %p167
      $region34: #{tpu_custom_call.1} parent=5 // pred_check_branch
        %170 = sbr.rel (%p168) target = $region36
      $region35: #{tpu_custom_call.1} parent=5 // pred_region
        %s171 = ssub.s32 %s18, 2
        // Predicated region
        $region37: #{tpu_custom_call.1} parent=35 // pred_check
          %p172 = pneg %p73
        $region38: #{tpu_custom_call.1} parent=35 // pred_check_branch
          %174 = sbr.rel (%p172) target = $region40
        $region39: #{tpu_custom_call.1} parent=35 // pred_region
          %s175 = sand.u32 %s58, 1
          %s176 = scalar_lea.sflag [#allocation6], %s175
          %s177 = sand.u32 %s58, 1
          %s178 = smul.addr %s177, 8
          %s179 = scalar_lea.vmem [#allocation7], %s178
          %180 = dma.done %s176, 128
        $region40: #{tpu_custom_call.1} parent=35 // pred_fallthru
          _
      $region36: #{tpu_custom_call.1} parent=5 // pred_fallthru
        _
    $region6: #{tpu_custom_call.1} parent=1 // loop_footer
      %s22 = sadd.s32 1, %s18
    $region7: #{tpu_custom_call.1} parent=1 // loop_footer_branch
      %17 = sbr.rel target = $region3
    $region8: #{tpu_custom_call.1} parent=1 // loop_exit
      _
    %181 = vsyncpa [#allocation5], 1
    %s182 = scalar_lea.sflag [#allocation5], 1
    %183 = vsyncpa %s182, 1
    %184 = vsyncpa [#allocation6], 1
    %s185 = scalar_lea.sflag [#allocation6], 1
    %186 = vsyncpa %s185, 1

</llo_original>
